<compile_context>
chip_gen: v7x
topology: tpu7x:2x2x1
jax: 0.10.0
libtpu: 0.0.40
codegen_flags: <defaults>
</compile_context>

<pallas_src>
import math

import jax
import jax.numpy as jnp
from jax.experimental import pallas as pl
from jax.experimental.pallas import tpu as pltpu


# ---------------------------------------------------------------------------
# Kernel
# ---------------------------------------------------------------------------
def _upconcat_kernel(x_ref, w_ref, b_ref, d_ref, o_ref):
    """One block of image rows of the fused UpConcat.

    x_ref: (rb*W, Cin)        input rows (NHWC-flattened), original dtype
    w_ref: (Cin, 4*Cout)      fused tap-major weights (kh, kw, c), compute dtype
    b_ref: (1, 4*Cout)        fused bias, f32 (resident)
    d_ref: (rb, 2, W, 2*Cd)   skip connection, laid out (row, kh, w, kw*Cd + c)
    o_ref: (rb, 2, W, 2*Ctot) concat output, laid out (row, kh, w, kw*Ctot + c)
    """
    rb, _, W = o_ref.shape[:3]
    cout4 = w_ref.shape[1]
    cout = cout4 // 4
    cd = d_ref.shape[-1] // 2
    odt = o_ref.dtype

    x = x_ref[...]
    if x.dtype != w_ref.dtype:                 # in-kernel MXU-feed cast (no HBM pass)
        x = x.astype(w_ref.dtype)
    y = jnp.dot(x, w_ref[...], preferred_element_type=jnp.float32) + b_ref[...]
    y = y.reshape(rb, W, cout4)                # sublane split only (free when W % 8 == 0)

    d = d_ref[...]
    for kh in range(2):                        # static unroll over the two output rows
        dk = d[:, kh]                                          # (rb, W, 2*Cd)
        yk = y[..., kh * 2 * cout:(kh + 1) * 2 * cout]         # static lane slice
        # Per output pixel: [down channels, deconv channels]; kw-major in lanes,
        # so the final (N, 2H, 2W, Cd+Cout) is a pure reshape of this layout.
        row = jnp.concatenate(
            [dk[..., :cd].astype(odt),
             yk[..., :cout].astype(odt),
             dk[..., cd:].astype(odt),
             yk[..., cout:].astype(odt)],
            axis=-1)                                           # (rb, W, 2*(Cd+Cout))
        o_ref[:, kh, :, :] = row


# ---------------------------------------------------------------------------
# Tiling / VMEM configuration
# ---------------------------------------------------------------------------
def _vmem_config():
    """Generation-aware (budget, vmem_limit, tm_max): 128 MiB VMEM v5e/v6e, 64 MiB v7x."""
    cap = 64 * 2**20
    try:
        cap = int(getattr(pltpu.get_tpu_info(), "vmem_capacity_bytes", cap))
    except Exception:
        pass
    if cap >= 100 * 2**20:                      # v5e / v6e
        return 80 * 2**20, 96 * 2**20, 4096
    return 28 * 2**20, 48 * 2**20, 2048         # v7x (32 MiB scoped default)


def _pick_rows_per_block(NH, W, Cin, Cd, Cout, x_bytes, cdt_bytes, d_bytes, o_bytes,
                         *, vmem_budget, tm_max):
    """Largest whole-image-row block whose pipelined tiles + resident weights fit."""
    cout4 = 4 * Cout
    ctot = Cd + Cout
    w_cost = 2 * (Cin * cout4 * cdt_bytes + cout4 * 4)      # resident weights + f32 bias
    per_row = (2 * W * Cin * x_bytes                        # x tile (double-buffered)
               + 2 * 4 * W * Cd * d_bytes                   # down tile (double-buffered)
               + 2 * 4 * W * ctot * o_bytes                 # out tile (double-buffered)
               + 2 * W * cout4 * 4)                         # f32 matmul / concat scratch
    rows = (vmem_budget - w_cost) // per_row
    rows = int(max(1, min(rows, max(1, tm_max // W), NH)))
    rows = min(rows, max(1, -(-NH // 2)))                   # >=2 grid blocks (v7x megacore)
    sub = 16 if cdt_bytes < 4 else 8                        # bf16 sublane packing
    for mult in (256, sub):                                 # prefer full MXU LHS passes
        step = mult // math.gcd(W, mult)
        if rows >= step:
            rows = (rows // step) * step
            break
    return max(1, int(rows))


# ---------------------------------------------------------------------------
# pallas_call wrapper
# ---------------------------------------------------------------------------
def _upconcat_call(x_flat, w_fused, b_fused, down_r, *, out_dtype, rows, vmem_limit):
    M, Cin = x_flat.shape
    cout4 = w_fused.shape[1]
    NH, _, W, cd2 = down_r.shape
    ctot2 = cd2 + cout4 // 2                                # 2 * (Cd + Cout)

    bytes_accessed = (x_flat.size * x_flat.dtype.itemsize
                      + w_fused.size * w_fused.dtype.itemsize
                      + b_fused.size * b_fused.dtype.itemsize
                      + down_r.size * down_r.dtype.itemsize
                      + NH * 2 * W * ctot2 * jnp.dtype(out_dtype).itemsize)
    cost = pl.CostEstimate(flops=2 * M * Cin * cout4,
                           transcendentals=0,
                           bytes_accessed=int(bytes_accessed))

    return pl.pallas_call(
        _upconcat_kernel,
        out_shape=jax.ShapeDtypeStruct((NH, 2, W, ctot2), out_dtype),
        grid=(pl.cdiv(NH, rows),),
        in_specs=[
            pl.BlockSpec((rows * W, Cin), lambda i: (i, 0)),           # pipelined x rows
            pl.BlockSpec((Cin, cout4), lambda i: (0, 0)),              # resident weights
            pl.BlockSpec((1, cout4), lambda i: (0, 0)),                # resident bias
            pl.BlockSpec((rows, 2, W, cd2), lambda i: (i, 0, 0, 0)),   # pipelined skip rows
        ],
        out_specs=pl.BlockSpec((rows, 2, W, ctot2), lambda i: (i, 0, 0, 0)),
        compiler_params=pltpu.CompilerParams(
            dimension_semantics=("parallel",),                         # 2 TCs on v7x
            vmem_limit_bytes=vmem_limit,
        ),
        cost_estimate=cost,
    )(x_flat, w_fused, b_fused, down_r)


# ---------------------------------------------------------------------------
# User-facing wrappers
# ---------------------------------------------------------------------------
def up_concat_nhwc(inputs_nhwc, down_nhwc, weight, bias, *,
                   compute_dtype=jnp.bfloat16, out_dtype=None, tm_max=None):
    """NHWC-native UpConcat (preferred: no boundary transposes).

    inputs_nhwc: (N, H, W, Cin)
    down_nhwc:   (N, 2H, 2W, Cd)
    weight:      (Cin, Cout, 2, 2)   PyTorch ConvTranspose2d layout
    bias:        (Cout,)
    returns:     (N, 2H, 2W, Cd + Cout), dtype = out_dtype (default: down dtype)
    """
    N, H, W, Cin = inputs_nhwc.shape
    Cout = weight.shape[1]
    Nd, H2, W2, Cd = down_nhwc.shape
    assert (Nd, H2, W2) == (N, 2 * H, 2 * W), (inputs_nhwc.shape, down_nhwc.shape)

    out_dtype = jnp.dtype(down_nhwc.dtype if out_dtype is None else out_dtype)
    cdt = jnp.dtype(inputs_nhwc.dtype if compute_dtype is None else compute_dtype)

    # (Cin, Cout, kh, kw) -> (Cin, kh, kw, Cout) -> (Cin, 4*Cout): tap-major lanes.
    w_fused = jnp.transpose(weight, (0, 2, 3, 1)).reshape(Cin, 4 * Cout).astype(cdt)
    b_fused = jnp.tile(bias.astype(jnp.float32), 4).reshape(1, 4 * Cout)

    x_flat = inputs_nhwc.reshape(N * H * W, Cin)      # no wrapper-side cast (done in-kernel)
    down_r = down_nhwc.reshape(N * H, 2, W, 2 * Cd)   # pure row-major reshape

    budget, vmem_limit, tm_cap = _vmem_config()
    tm_cap = tm_cap if tm_max is None else tm_max
    rows = _pick_rows_per_block(
        N * H, W, Cin, Cd, Cout,
        jnp.dtype(inputs_nhwc.dtype).itemsize, cdt.itemsize,
        jnp.dtype(down_nhwc.dtype).itemsize, out_dtype.itemsize,
        vmem_budget=budget, tm_max=tm_cap)

    out4 = _upconcat_call(x_flat, w_fused, b_fused, down_r,
                          out_dtype=out_dtype, rows=rows, vmem_limit=vmem_limit)
    # (N*H, 2, W, 2*(Cd+Cout)) -> (N, 2H, 2W, Cd+Cout) is a pure row-major reshape.
    return out4.reshape(N, 2 * H, 2 * W, Cd + Cout)


def up_concat(inputs, down_outputs, weight, bias, **kwargs):
    """PyTorch-convention NCHW wrapper.  In production keep the whole UNet NHWC
    and call up_concat_nhwc directly; these transposes are full HBM passes."""
    x_nhwc = jnp.transpose(inputs, (0, 2, 3, 1))
    d_nhwc = jnp.transpose(down_outputs, (0, 2, 3, 1))
    out_nhwc = up_concat_nhwc(x_nhwc, d_nhwc, weight, bias, **kwargs)
    return jnp.transpose(out_nhwc, (0, 3, 1, 2))


# ---------------------------------------------------------------------------
# Reference + test
# ---------------------------------------------------------------------------
def _reference(inputs, down_outputs, weight, bias):
    """Pure-JAX reference of ConvTranspose2d(k=2, s=2) + concat (NCHW)."""
    N, Cin, H, W = inputs.shape
    Cout = weight.shape[1]
    y = jnp.einsum("nchw,cokl->nohkwl", inputs, weight)
    y = y.reshape(N, Cout, 2 * H, 2 * W) + bias[None, :, None, None]
    return jnp.concatenate([down_outputs, y], axis=1)


if __name__ == "__main__":
    key = jax.random.PRNGKey(0)
    k1, k2, k3, k4 = jax.random.split(key, 4)

    N, in_feat, out_feat, H, W = 2, 8, 4, 8, 8
    down_ch = out_feat            # as in the UNet: skip channels == deconv out channels

    inputs = jax.random.normal(k1, (N, in_feat, H, W), dtype=jnp.float32)
    down_outputs = jax.random.normal(k2, (N, down_ch, 2 * H, 2 * W), dtype=jnp.float32)
    weight = 0.1 * jax.random.normal(k3, (in_feat, out_feat, 2, 2), dtype=jnp.float32)
    bias = 0.1 * jax.random.normal(k4, (out_feat,), dtype=jnp.float32)

    ref = _reference(inputs, down_outputs, weight, bias)

    # 1) f32 MXU feed: strict correctness check.
    out_f32 = jax.block_until_ready(
        up_concat(inputs, down_outputs, weight, bias, compute_dtype=jnp.float32))
    assert out_f32.shape == (N, down_ch + out_feat, 2 * H, 2 * W), out_f32.shape
    assert jnp.allclose(out_f32, ref, atol=1e-5, rtol=1e-5), "f32 mismatch vs reference"

    # 2) Multi-block grid + partial last tile (rows=3 does not divide N*H=16).
    out_edge = jax.block_until_ready(
        up_concat(inputs, down_outputs, weight, bias,
                  compute_dtype=jnp.float32, tm_max=3 * W))
    assert jnp.allclose(out_edge, ref, atol=1e-5, rtol=1e-5), "partial-tile mismatch"

    # 3) Default bf16 MXU feed (f32 accumulation): loose tolerance on the deconv part.
    out_bf16 = jax.block_until_ready(up_concat(inputs, down_outputs, weight, bias))
    assert out_bf16.shape == out_f32.shape
    assert jnp.allclose(out_bf16, ref, atol=3e-2, rtol=3e-2), "bf16 mismatch vs reference"

    print("KERNEL_OK")
</pallas_src>

<mosaic_0001>
module attributes {stable_mosaic.version = 11 : i64} {
  func.func @_upconcat_kernel(%arg0: i32, %arg1: memref<64x8xf32, #tpu.memory_space<vmem>>, %arg2: memref<8x16xf32, #tpu.memory_space<vmem>>, %arg3: memref<1x16xf32, #tpu.memory_space<vmem>>, %arg4: memref<8x2x8x8xf32, #tpu.memory_space<vmem>>, %arg5: memref<8x2x8x16xf32, #tpu.memory_space<vmem>>) attributes {dimension_semantics = [#tpu.dimension_semantics<parallel>], iteration_bounds = array<i64: 2>, scalar_prefetch = 0 : i64, scratch_operands = 0 : i64, tpu.core_type = #tpu.core_type<tc>, window_params = [{transform_indices = @transform_0, window_bounds = array<i64: 64, 8>}, {pipeline_mode = #tpu.pipeline_mode<synchronous>, transform_indices = @transform_1, window_bounds = array<i64: 8, 16>}, {pipeline_mode = #tpu.pipeline_mode<synchronous>, transform_indices = @transform_2, window_bounds = array<i64: 1, 16>}, {transform_indices = @transform_3, window_bounds = array<i64: 8, 2, 8, 8>}, {transform_indices = @transform_4, window_bounds = array<i64: 8, 2, 8, 16>}]} {
    %c0 = arith.constant 0 : index
    %c0_0 = arith.constant 0 : index
    %0 = vector.load %arg1[%c0, %c0_0] : memref<64x8xf32, #tpu.memory_space<vmem>>, vector<64x8xf32>
    %c0_1 = arith.constant 0 : index
    %c0_2 = arith.constant 0 : index
    %1 = vector.load %arg2[%c0_1, %c0_2] : memref<8x16xf32, #tpu.memory_space<vmem>>, vector<8x16xf32>
    %cst = arith.constant dense<0.000000e+00> : vector<64x16xf32>
    %2 = tpu.matmul %0, %1, %cst {dimension_numbers = #tpu.dot_dimension_numbers<[1], [0], [0], [1], [0, 0, 1, 1], [], []>} : vector<64x8xf32>, vector<8x16xf32>, vector<64x16xf32> -> vector<64x16xf32>
    %c0_3 = arith.constant 0 : index
    %c0_4 = arith.constant 0 : index
    %3 = vector.load %arg3[%c0_3, %c0_4] : memref<1x16xf32, #tpu.memory_space<vmem>>, vector<1x16xf32>
    %4 = vector.broadcast %3 : vector<1x16xf32> to vector<64x16xf32>
    %5 = arith.addf %2, %4 : vector<64x16xf32>
    %6 = vector.shape_cast %5 : vector<64x16xf32> to vector<8x8x16xf32>
    %c0_5 = arith.constant 0 : index
    %c0_6 = arith.constant 0 : index
    %c0_7 = arith.constant 0 : index
    %c0_8 = arith.constant 0 : index
    %7 = vector.load %arg4[%c0_5, %c0_6, %c0_7, %c0_8] : memref<8x2x8x8xf32, #tpu.memory_space<vmem>>, vector<8x2x8x8xf32>
    %8 = vector.extract_strided_slice %7 {offsets = [0, 0, 0, 0], sizes = [8, 1, 8, 8], strides = [1, 1, 1, 1]} : vector<8x2x8x8xf32> to vector<8x1x8x8xf32>
    %9 = vector.shape_cast %8 : vector<8x1x8x8xf32> to vector<8x8x8xf32>
    %10 = vector.extract_strided_slice %6 {offsets = [0, 0, 0], sizes = [8, 8, 8], strides = [1, 1, 1]} : vector<8x8x16xf32> to vector<8x8x8xf32>
    %11 = vector.extract_strided_slice %9 {offsets = [0, 0, 0], sizes = [8, 8, 4], strides = [1, 1, 1]} : vector<8x8x8xf32> to vector<8x8x4xf32>
    %12 = vector.extract_strided_slice %10 {offsets = [0, 0, 0], sizes = [8, 8, 4], strides = [1, 1, 1]} : vector<8x8x8xf32> to vector<8x8x4xf32>
    %13 = vector.extract_strided_slice %9 {offsets = [0, 0, 4], sizes = [8, 8, 4], strides = [1, 1, 1]} : vector<8x8x8xf32> to vector<8x8x4xf32>
    %14 = vector.extract_strided_slice %10 {offsets = [0, 0, 4], sizes = [8, 8, 4], strides = [1, 1, 1]} : vector<8x8x8xf32> to vector<8x8x4xf32>
    %15 = tpu.concatenate %11, %12, %13, %14 in 2 : vector<8x8x4xf32>, vector<8x8x4xf32>, vector<8x8x4xf32>, vector<8x8x4xf32> -> vector<8x8x16xf32>
    %c0_9 = arith.constant 0 : index
    %c0_10 = arith.constant 0 : index
    %c0_11 = arith.constant 0 : index
    %c0_12 = arith.constant 0 : index
    %16 = vector.load %arg5[%c0_9, %c0_10, %c0_11, %c0_12] : memref<8x2x8x16xf32, #tpu.memory_space<vmem>>, vector<8x1x8x16xf32>
    %17 = vector.shape_cast %16 : vector<8x1x8x16xf32> to vector<8x8x16xf32>
    %18 = vector.shape_cast %15 : vector<8x8x16xf32> to vector<8x1x8x16xf32>
    tpu.vector_store %arg5[%c0_9, %c0_10, %c0_11, %c0_12], %18 {strides = array<i32>} : memref<8x2x8x16xf32, #tpu.memory_space<vmem>>, vector<8x1x8x16xf32>,
    %19 = vector.extract_strided_slice %7 {offsets = [0, 1, 0, 0], sizes = [8, 1, 8, 8], strides = [1, 1, 1, 1]} : vector<8x2x8x8xf32> to vector<8x1x8x8xf32>
    %20 = vector.shape_cast %19 : vector<8x1x8x8xf32> to vector<8x8x8xf32>
    %21 = vector.extract_strided_slice %6 {offsets = [0, 0, 8], sizes = [8, 8, 8], strides = [1, 1, 1]} : vector<8x8x16xf32> to vector<8x8x8xf32>
    %22 = vector.extract_strided_slice %20 {offsets = [0, 0, 0], sizes = [8, 8, 4], strides = [1, 1, 1]} : vector<8x8x8xf32> to vector<8x8x4xf32>
    %23 = vector.extract_strided_slice %21 {offsets = [0, 0, 0], sizes = [8, 8, 4], strides = [1, 1, 1]} : vector<8x8x8xf32> to vector<8x8x4xf32>
    %24 = vector.extract_strided_slice %20 {offsets = [0, 0, 4], sizes = [8, 8, 4], strides = [1, 1, 1]} : vector<8x8x8xf32> to vector<8x8x4xf32>
    %25 = vector.extract_strided_slice %21 {offsets = [0, 0, 4], sizes = [8, 8, 4], strides = [1, 1, 1]} : vector<8x8x8xf32> to vector<8x8x4xf32>
    %26 = tpu.concatenate %22, %23, %24, %25 in 2 : vector<8x8x4xf32>, vector<8x8x4xf32>, vector<8x8x4xf32>, vector<8x8x4xf32> -> vector<8x8x16xf32>
    %c0_13 = arith.constant 0 : index
    %c1 = arith.constant 1 : index
    %c0_14 = arith.constant 0 : index
    %c0_15 = arith.constant 0 : index
    %27 = vector.load %arg5[%c0_13, %c1, %c0_14, %c0_15] : memref<8x2x8x16xf32, #tpu.memory_space<vmem>>, vector<8x1x8x16xf32>
    %28 = vector.shape_cast %27 : vector<8x1x8x16xf32> to vector<8x8x16xf32>
    %29 = vector.shape_cast %26 : vector<8x8x16xf32> to vector<8x1x8x16xf32>
    tpu.vector_store %arg5[%c0_13, %c1, %c0_14, %c0_15], %29 {strides = array<i32>} : memref<8x2x8x16xf32, #tpu.memory_space<vmem>>, vector<8x1x8x16xf32>,
    return
  }
  func.func @transform_0(%arg0: i32) -> (i32, i32) {
    %c0_i32 = arith.constant 0 : i32
    %c0_i32_0 = arith.constant 0 : i32
    return %arg0, %c0_i32 : i32, i32
  }
  func.func @transform_1(%arg0: i32) -> (i32, i32) {
    %c0_i32 = arith.constant 0 : i32
    %c0_i32_0 = arith.constant 0 : i32
    %c0_i32_1 = arith.constant 0 : i32
    return %c0_i32, %c0_i32_0 : i32, i32
  }
  func.func @transform_2(%arg0: i32) -> (i32, i32) {
    %c0_i32 = arith.constant 0 : i32
    %c0_i32_0 = arith.constant 0 : i32
    %c0_i32_1 = arith.constant 0 : i32
    return %c0_i32, %c0_i32_0 : i32, i32
  }
  func.func @transform_3(%arg0: i32) -> (i32, i32, i32, i32) {
    %c0_i32 = arith.constant 0 : i32
    %c0_i32_0 = arith.constant 0 : i32
    %c0_i32_1 = arith.constant 0 : i32
    %c0_i32_2 = arith.constant 0 : i32
    return %arg0, %c0_i32, %c0_i32_0, %c0_i32_1 : i32, i32, i32, i32
  }
  func.func @transform_4(%arg0: i32) -> (i32, i32, i32, i32) {
    %c0_i32 = arith.constant 0 : i32
    %c0_i32_0 = arith.constant 0 : i32
    %c0_i32_1 = arith.constant 0 : i32
    %c0_i32_2 = arith.constant 0 : i32
    return %arg0, %c0_i32, %c0_i32_0, %c0_i32_1 : i32, i32, i32, i32
  }
}

</mosaic_0001>

<llo_original>
// kernel: tpu_custom_call.1
$region0: #{tpu_custom_call.1}
  #allocation0 [shape = 'u32[]', space=smem, size = 0x4, offset = 0x4, fixed_abs, tag = 'smem constant byte address 0x4 - core index']
  #allocation1 [shape = 'u32[144,128]{1,0:T(1,128)}', space=vmem, size = 0x12000, scoped, tag = 'internal scratch']
  %s0 = inlined_call_operand.vmem [shape: f32[128,8], index: 0, kind: input, shape index: {}]
  %s1 = inlined_call_operand.vmem [shape: f32[8,16], index: 1, kind: input, shape index: {}]
  %s2 = inlined_call_operand.vmem [shape: f32[1,16], index: 2, kind: input, shape index: {}]
  %s3 = inlined_call_operand.vmem [shape: f32[16,2,8,8], index: 3, kind: input, shape index: {}]
  %s4 = inlined_call_operand.hbm [shape: f32[16,2,8,16], index: 4, kind: output, shape index: {}]
  %s5 = sld [smem:[#allocation0]]
  $region49: #{tpu_custom_call.1} parent=0
    _
  %s7 = ssub.s32 1, %s5
  %s8 = scalar_select 0, %s7, %s5
  $region1: #{tpu_custom_call.1} parent=0
    #allocation2 [shape = 'u8[131072]{0}', space=vmem, size = 0x20000, scoped, tag = 'output window, operand 0']
    #allocation3 [shape = 's32[2]{0}', space=sflag, size = 0x8, scoped, tag = 'scoped memory for tpu_custom_call.1']
    %9 = vsyncpa [#allocation3], 0
    %s10 = scalar_lea.sflag [#allocation3], 1
    %11 = vsyncpa %s10, 0
    loop: start=0, step=1, limit=4
    $region2: #{tpu_custom_call.1} parent=1 // loop_pre_header
      _
    $region3: #{tpu_custom_call.1} parent=1 // loop_header
      %s13 = sphi 0, %s17
      %p14 = scmp.ge.s32.totalorder %s13, 4
      %s23 = sphi 0, %s25
      %s26 = sphi 0, %s23
      %s27 = sphi 0, %s26
      %s43 = sphi 0, %s27
      %s47 = sphi 0, %s47
      %s49 = sphi 0, %s47
      %s50 = sphi 0, %s49
      %s64 = sphi 0, %s50
      %s68 = sphi 0, %s68
      %s70 = sphi 0, %s68
      %s71 = sphi 0, %s70
      %s85 = sphi 0, %s71
      %s91 = sphi 0, %s93
      %s94 = sphi 0, %s91
      %s95 = sphi 0, %s94
      %s111 = sphi 0, %s95
      %s117 = sphi 0, %s119
      %s120 = sphi 0, %s117
      %s121 = sphi 0, %s120
      %s137 = sphi 0, %s121
    $region4: #{tpu_custom_call.1} parent=1 // loop_header_branch
      %16 = sbr.rel (%p14) target = $region8
    $region5: #{tpu_custom_call.1} parent=1 // loop_body
      %s18 = ssub.s32 %s13, 1
      %s19 = ssub.s32 %s13, 2
      %s20 = sadd.s32 %s13, 1
      %s21 = ssub.s32 %s13, %s20
      %p22 = scmp.eq.s32.totalorder %s21, 0
      %s24 = sadd.s32 %s23, 1
      %s25 = scalar_select %p22, %s23, %s24
      %p28 = pneg %p22
      %p29 = scmp.eq.s32.totalorder %s13, 1
      %p30 = por %p28, %p29
      %p31 = scmp.ne.s32.totalorder %s23, %s26
      %p32 = scmp.eq.s32.totalorder %s13, 0
      %p33 = por %p31, %p32
      %p34 = scmp.ne.s32.totalorder %s23, %s26
      %p35 = scmp.eq.s32.totalorder %s18, 1
      %p36 = por %p34, %p35
      %p37 = scmp.ne.s32.totalorder %s26, %s27
      %p38 = scmp.eq.s32.totalorder %s18, 0
      %p39 = por %p37, %p38
      %p40 = scmp.ne.s32.totalorder %s26, %s27
      %p41 = scmp.eq.s32.totalorder %s19, 1
      %p42 = por %p40, %p41
      %p44 = scmp.ne.s32.totalorder %s27, %s43
      %p45 = scmp.eq.s32.totalorder %s19, 0
      %p46 = por %p44, %p45
      %s48 = sadd.s32 %s47, 1
      %p51 = scmp.eq.s32.totalorder %s13, 1
      %p52 = scmp.ne.s32.totalorder %s47, %s49
      %p53 = scmp.eq.s32.totalorder %s13, 0
      %p54 = por %p52, %p53
      %p55 = scmp.ne.s32.totalorder %s47, %s49
      %p56 = scmp.eq.s32.totalorder %s18, 1
      %p57 = por %p55, %p56
      %p58 = scmp.ne.s32.totalorder %s49, %s50
      %p59 = scmp.eq.s32.totalorder %s18, 0
      %p60 = por %p58, %p59
      %p61 = scmp.ne.s32.totalorder %s49, %s50
      %p62 = scmp.eq.s32.totalorder %s19, 1
      %p63 = por %p61, %p62
      %p65 = scmp.ne.s32.totalorder %s50, %s64
      %p66 = scmp.eq.s32.totalorder %s19, 0
      %p67 = por %p65, %p66
      %s69 = sadd.s32 %s68, 1
      %p72 = scmp.eq.s32.totalorder %s13, 1
      %p73 = scmp.ne.s32.totalorder %s68, %s70
      %p74 = scmp.eq.s32.totalorder %s13, 0
      %p75 = por %p73, %p74
      %p76 = scmp.ne.s32.totalorder %s68, %s70
      %p77 = scmp.eq.s32.totalorder %s18, 1
      %p78 = por %p76, %p77
      %p79 = scmp.ne.s32.totalorder %s70, %s71
      %p80 = scmp.eq.s32.totalorder %s18, 0
      %p81 = por %p79, %p80
      %p82 = scmp.ne.s32.totalorder %s70, %s71
      %p83 = scmp.eq.s32.totalorder %s19, 1
      %p84 = por %p82, %p83
      %p86 = scmp.ne.s32.totalorder %s71, %s85
      %p87 = scmp.eq.s32.totalorder %s19, 0
      %p88 = por %p86, %p87
      %s89 = ssub.s32 %s13, %s20
      %p90 = scmp.eq.s32.totalorder %s89, 0
      %s92 = sadd.s32 %s91, 1
      %s93 = scalar_select %p90, %s91, %s92
      %p96 = pneg %p90
      %p97 = scmp.eq.s32.totalorder %s13, 1
      %p98 = por %p96, %p97
      %p99 = scmp.ne.s32.totalorder %s91, %s94
      %p100 = scmp.eq.s32.totalorder %s13, 0
      %p101 = por %p99, %p100
      %p102 = scmp.ne.s32.totalorder %s91, %s94
      %p103 = scmp.eq.s32.totalorder %s18, 1
      %p104 = por %p102, %p103
      %p105 = scmp.ne.s32.totalorder %s94, %s95
      %p106 = scmp.eq.s32.totalorder %s18, 0
      %p107 = por %p105, %p106
      %p108 = scmp.ne.s32.totalorder %s94, %s95
      %p109 = scmp.eq.s32.totalorder %s19, 1
      %p110 = por %p108, %p109
      %p112 = scmp.ne.s32.totalorder %s95, %s111
      %p113 = scmp.eq.s32.totalorder %s19, 0
      %p114 = por %p112, %p113
      %s115 = ssub.s32 %s13, %s20
      %p116 = scmp.eq.s32.totalorder %s115, 0
      %s118 = sadd.s32 %s117, 1
      %s119 = scalar_select %p116, %s117, %s118
      %p122 = pneg %p116
      %p123 = scmp.eq.s32.totalorder %s13, 1
      %p124 = por %p122, %p123
      %p125 = scmp.ne.s32.totalorder %s117, %s120
      %p126 = scmp.eq.s32.totalorder %s13, 0
      %p127 = por %p125, %p126
      %p128 = scmp.ne.s32.totalorder %s117, %s120
      %p129 = scmp.eq.s32.totalorder %s18, 1
      %p130 = por %p128, %p129
      %p131 = scmp.ne.s32.totalorder %s120, %s121
      %p132 = scmp.eq.s32.totalorder %s18, 0
      %p133 = por %p131, %p132
      %p134 = scmp.ne.s32.totalorder %s120, %s121
      %p135 = scmp.eq.s32.totalorder %s19, 1
      %p136 = por %p134, %p135
      %p138 = scmp.ne.s32.totalorder %s121, %s137
      %p139 = scmp.eq.s32.totalorder %s19, 0
      %p140 = por %p138, %p139
      %p141 = scmp.le.s32.totalorder 1, %s13
      %p142 = scmp.lt.s32.totalorder %s13, 3
      %p143 = pnand %p141, %p142
      %p144 = pneg %p143
      // Predicated region
      $region9: #{tpu_custom_call.1} parent=5 // pred_check
        _
      $region10: #{tpu_custom_call.1} parent=5 // pred_check_branch
        %146 = sbr.rel (%p143) target = $region12
      $region11: #{tpu_custom_call.1} parent=5 // pred_region
        %s147 = ssub.s32 %s13, 1
        // Predicated region
        $region13: #{tpu_custom_call.1} parent=11 // pred_check
          %p148 = pneg %p60
        $region14: #{tpu_custom_call.1} parent=11 // pred_check_branch
          %150 = sbr.rel (%p148) target = $region16
        $region15: #{tpu_custom_call.1} parent=11 // pred_region
          _
        $region16: #{tpu_custom_call.1} parent=11 // pred_fallthru
          _
        // Predicated region
        $region17: #{tpu_custom_call.1} parent=11 // pred_check
          %p151 = pneg %p81
        $region18: #{tpu_custom_call.1} parent=11 // pred_check_branch
          %153 = sbr.rel (%p151) target = $region20
        $region19: #{tpu_custom_call.1} parent=11 // pred_region
          _
        $region20: #{tpu_custom_call.1} parent=11 // pred_fallthru
          _
      $region12: #{tpu_custom_call.1} parent=5 // pred_fallthru
        _
      %p154 = scmp.lt.s32.totalorder %s13, 2
      // Predicated region
      $region21: #{tpu_custom_call.1} parent=5 // pred_check
        %p155 = pneg %p154
      $region22: #{tpu_custom_call.1} parent=5 // pred_check_branch
        %157 = sbr.rel (%p155) target = $region24
      $region23: #{tpu_custom_call.1} parent=5 // pred_region
        // Predicated region
        $region25: #{tpu_custom_call.1} parent=23 // pred_check
          %p158 = pneg %p33
        $region26: #{tpu_custom_call.1} parent=23 // pred_check_branch
          %160 = sbr.rel (%p158) target = $region28
        $region27: #{tpu_custom_call.1} parent=23 // pred_region
          %s161 = smul.u32 8, %s13
          %p162 = scmp.lt.s32.totalorder %s161, 15
          %s163 = scalar_select %p162, %s161, 15
          %s164 = smul.addr %s163, 8
          %s165 = scalar_lea.vmem %s0, %s164
          %s166 = smul.u32 8, %s13
        $region28: #{tpu_custom_call.1} parent=23 // pred_fallthru
          _
        // Predicated region
        $region29: #{tpu_custom_call.1} parent=23 // pred_check
          %p167 = pneg %p101
        $region30: #{tpu_custom_call.1} parent=23 // pred_check_branch
          %169 = sbr.rel (%p167) target = $region32
        $region31: #{tpu_custom_call.1} parent=23 // pred_region
          %s170 = smul.u32 8, %s13
          %p171 = scmp.lt.s32.totalorder %s170, 15
          %s172 = scalar_select %p171, %s170, 15
          %s173 = smul.addr %s172, 2
          %s174 = smul.addr %s173, 8
          %s175 = scalar_lea.vmem %s3, %s174
          %s176 = smul.u32 8, %s13
        $region32: #{tpu_custom_call.1} parent=23 // pred_fallthru
          _
      $region24: #{tpu_custom_call.1} parent=5 // pred_fallthru
        _
      %p177 = scmp.le.s32.totalorder 1, %s13
      %p178 = scmp.lt.s32.totalorder %s13, 3
      %p179 = pnand %p177, %p178
      %p180 = pneg %p179
      // Predicated region
      $region33: #{tpu_custom_call.1} parent=5 // pred_check
        _
      $region34: #{tpu_custom_call.1} parent=5 // pred_check_branch
        %182 = sbr.rel (%p179) target = $region36
      $region35: #{tpu_custom_call.1} parent=5 // pred_region
        %s183 = ssub.s32 %s13, 1
        %s184 = smul.u32 8, %s18
        %p185 = scmp.lt.s32.totalorder %s184, 15
        %s186 = scalar_select %p185, %s184, 15
        %s187 = smul.addr %s186, 8
        %s188 = scalar_lea.vmem %s0, %s187
        %p189 = pneg %p39
        %p190 = pneg %p36
        %p191 = pneg %p60
        %p192 = pneg %p57
        %p193 = pneg %p81
        %p194 = pneg %p78
        %s195 = smul.u32 8, %s18
        %p196 = scmp.lt.s32.totalorder %s195, 15
        %s197 = scalar_select %p196, %s195, 15
        %s198 = smul.addr %s197, 2
        %s199 = smul.addr %s198, 8
        %s200 = scalar_lea.vmem %s3, %s199
        %p201 = pneg %p107
        %p202 = pneg %p104
        %p203 = pneg %p133
        %p204 = pneg %p130
        %s205 = sand.u32 %s120, 1
        %s206 = scalar_lea.sflag [#allocation3], %s205
        %s207 = sand.u32 %s120, 1
        %s208 = smul.addr %s207, 128
        %s209 = scalar_lea.vmem [#allocation2], %s208
        %s210 = smul.u32 8, %s18
        %p211 = scmp.lt.s32.totalorder %s210, 15
        %s212 = scalar_select %p211, %s210, 15
        %s213 = smul.addr %s212, 8
        %s214 = scalar_lea.vmem %s0, %s213
        %s215 = smul.u32 8, %s18
        %s216 = smul.u32 8, %s18
        %p217 = scmp.lt.s32.totalorder %s216, 15
        %s218 = scalar_select %p217, %s216, 15
        %s219 = smul.addr %s218, 2
        %s220 = smul.addr %s219, 8
        %s221 = scalar_lea.vmem %s3, %s220
        %s222 = smul.u32 8, %s18
        %s223 = smul.u32 8, %s18
        %v224 = vld [vmem:[%s214] sm:$0xff]
        %v225 = vld [vmem:[%s214 + $0x8] sm:$0xff]
        %v226 = vld [vmem:[%s214 + $0x10] sm:$0xff]
        %v227 = vld [vmem:[%s214 + $0x18] sm:$0xff]
        %v228 = vld [vmem:[%s214 + $0x20] sm:$0xff]
        %v229 = vld [vmem:[%s214 + $0x28] sm:$0xff]
        %v230 = vld [vmem:[%s214 + $0x30] sm:$0xff]
        %v231 = vld [vmem:[%s214 + $0x38] sm:$0xff]
        %v232 = vld [vmem:[%s1] sm:$0xff]
        %v233 = vld [vmem:[%s2] sm:$0x1]
        %v235 = vlaneseq
        %v236 = vshrl.u32 %v235, 7
        %v237 = vsub.s32 0, %v236
        %v238 = vrot.slane %v233, %v237
        %vm240 = vcmask 64512
        %v242 = vsel %vm240, %v224, 0
        %v245 = vsel %vm240, %v225, 0
        %v248 = vsel %vm240, %v226, 0
        %v251 = vsel %vm240, %v227, 0
        %v254 = vsel %vm240, %v228, 0
        %v257 = vsel %vm240, %v229, 0
        %v260 = vsel %vm240, %v230, 0
        %v263 = vsel %vm240, %v231, 0
        %265 = vmatprep.subr.mxu0 0.0
        %266 = vmatpush1.msra.mxu0 %v232
        %267 = vmatprep.subr.mxu0 0.0
        %268 = vmatpush1.msra.mxu0 0.0
        %269 = vmatprep.subr.mxu0 0.0
        %270 = vmatpush1.msra.mxu0 0.0
        %271 = vmatprep.subr.mxu0 0.0
        %272 = vmatpush1.msra.mxu0 0.0
        %273 = vmatprep.subr.mxu0 0.0
        %274 = vmatpush1.msra.mxu0 0.0
        %275 = vmatprep.subr.mxu0 0.0
        %276 = vmatpush1.msra.mxu0 0.0
        %277 = vmatprep.subr.mxu0 0.0
        %278 = vmatpush1.msra.mxu0 0.0
        %279 = vmatprep.subr.mxu0 0.0
        %280 = vmatpush1.msra.mxu0 0.0
        %281 = vmatprep.subr.mxu0 0.0
        %282 = vmatpush1.msra.mxu0 0.0
        %283 = vmatprep.subr.mxu0 0.0
        %284 = vmatpush1.msra.mxu0 0.0
        %285 = vmatprep.subr.mxu0 0.0
        %286 = vmatpush1.msra.mxu0 0.0
        %287 = vmatprep.subr.mxu0 0.0
        %288 = vmatpush1.msra.mxu0 0.0
        %289 = vmatprep.subr.mxu0 0.0
        %290 = vmatpush1.msra.mxu0 0.0
        %291 = vmatprep.subr.mxu0 0.0
        %292 = vmatpush1.msra.mxu0 0.0
        %293 = vmatprep.subr.mxu0 0.0
        %294 = vmatpush1.msra.mxu0 0.0
        %295 = vmatprep.subr.mxu0 0.0
        %296 = vmatpush1.msra.mxu0 0.0
        %297 = vmatprep.subr.mxu0 0.0
        %298 = vmatpush1.msra.mxu0 0.0
        %299 = vmatprep.subr.mxu0 0.0
        %300 = vmatpush1.msra.mxu0 0.0
        %301 = vmatprep.subr.mxu0 0.0
        %302 = vmatpush1.msra.mxu0 0.0
        %303 = vmatprep.subr.mxu0 0.0
        %304 = vmatpush1.msra.mxu0 0.0
        %305 = vmatprep.subr.mxu0 0.0
        %306 = vmatpush1.msra.mxu0 0.0
        %307 = vmatprep.subr.mxu0 0.0
        %308 = vmatpush1.msra.mxu0 0.0
        %309 = vmatprep.subr.mxu0 0.0
        %310 = vmatpush1.msra.mxu0 0.0
        %311 = vmatprep.subr.mxu0 0.0
        %312 = vmatpush1.msra.mxu0 0.0
        %313 = vmatprep.subr.mxu0 0.0
        %314 = vmatpush1.msra.mxu0 0.0
        %315 = vmatprep.subr.mxu0 0.0
        %316 = vmatpush1.msra.mxu0 0.0
        %317 = vmatprep.subr.mxu0 0.0
        %318 = vmatpush1.msra.mxu0 0.0
        %319 = vmatprep.subr.mxu0 0.0
        %320 = vmatpush1.msra.mxu0 0.0
        %321 = vmatprep.subr.mxu0 0.0
        %322 = vmatpush1.msra.mxu0 0.0
        %323 = vmatprep.subr.mxu0 0.0
        %324 = vmatpush1.msra.mxu0 0.0
        %325 = vmatprep.subr.mxu0 0.0
        %326 = vmatpush1.msra.mxu0 0.0
        %327 = vmatprep.subr.mxu0 0.0
        %328 = vmatpush1.msra.mxu0 0.0
        %329 = vmatprep.mubr.f32.mxu0 0.0
        %330 = vmatmul.mubr.f32.gmra.mrb[0].mxu0 %v242
        %v331 = vpop.f32.mrb[0].mxu0
        %v332 = vadd.f32 %v238, %v331
        %v333 = vpop.f32.mrb[0].mxu0
        %334 = vmatprep.mubr.f32.mxu0 0.0
        %335 = vmatmul.mubr.f32.gmra.mrb[0].mxu0 %v245
        %v336 = vpop.f32.mrb[0].mxu0
        %v337 = vadd.f32 %v238, %v336
        %v338 = vpop.f32.mrb[0].mxu0
        %339 = vmatprep.mubr.f32.mxu0 0.0
        %340 = vmatmul.mubr.f32.gmra.mrb[0].mxu0 %v248
        %v341 = vpop.f32.mrb[0].mxu0
        %v342 = vadd.f32 %v238, %v341
        %v343 = vpop.f32.mrb[0].mxu0
        %344 = vmatprep.mubr.f32.mxu0 0.0
        %345 = vmatmul.mubr.f32.gmra.mrb[0].mxu0 %v251
        %v346 = vpop.f32.mrb[0].mxu0
        %v347 = vadd.f32 %v238, %v346
        %v348 = vpop.f32.mrb[0].mxu0
        %349 = vmatprep.mubr.f32.mxu0 0.0
        %350 = vmatmul.mubr.f32.gmra.mrb[0].mxu0 %v254
        %v351 = vpop.f32.mrb[0].mxu0
        %v352 = vadd.f32 %v238, %v351
        %v353 = vpop.f32.mrb[0].mxu0
        %354 = vmatprep.mubr.f32.mxu0 0.0
        %355 = vmatmul.mubr.f32.gmra.mrb[0].mxu0 %v257
        %v356 = vpop.f32.mrb[0].mxu0
        %v357 = vadd.f32 %v238, %v356
        %v358 = vpop.f32.mrb[0].mxu0
        %359 = vmatprep.mubr.f32.mxu0 0.0
        %360 = vmatmul.mubr.f32.gmra.mrb[0].mxu0 %v260
        %v361 = vpop.f32.mrb[0].mxu0
        %v362 = vadd.f32 %v238, %v361
        %v363 = vpop.f32.mrb[0].mxu0
        %364 = vmatprep.mubr.f32.mxu0 0.0
        %365 = vmatmul.mubr.f32.gmra.mrb[0].mxu0 %v263
        %v366 = vpop.f32.mrb[0].mxu0
        %v367 = vadd.f32 %v238, %v366
        %v368 = vpop.f32.mrb[0].mxu0
        %369 = vdwg.mxu0
        %v370 = vld [vmem:[%s221] sm:$0xff]
        %v371 = vld [vmem:[%s221 + $0x8] sm:$0xff]
        %v372 = vld [vmem:[%s221 + $0x10] sm:$0xff]
        %v373 = vld [vmem:[%s221 + $0x18] sm:$0xff]
        %v374 = vld [vmem:[%s221 + $0x20] sm:$0xff]
        %v375 = vld [vmem:[%s221 + $0x28] sm:$0xff]
        %v376 = vld [vmem:[%s221 + $0x30] sm:$0xff]
        %v377 = vld [vmem:[%s221 + $0x38] sm:$0xff]
        %v378 = vld [vmem:[%s221 + $0x40] sm:$0xff]
        %v379 = vld [vmem:[%s221 + $0x48] sm:$0xff]
        %v380 = vld [vmem:[%s221 + $0x50] sm:$0xff]
        %v381 = vld [vmem:[%s221 + $0x58] sm:$0xff]
        %v382 = vld [vmem:[%s221 + $0x60] sm:$0xff]
        %v383 = vld [vmem:[%s221 + $0x68] sm:$0xff]
        %v384 = vld [vmem:[%s221 + $0x70] sm:$0xff]
        %v385 = vld [vmem:[%s221 + $0x78] sm:$0xff]
        %394 = vrot.lane.b32.xlu0 %v332, 4
        %v395 = vpop.permute.xlu0 %394
        %396 = vrot.lane.b32.xlu0 %v337, 4
        %v397 = vpop.permute.xlu0 %396
        %398 = vrot.lane.b32.xlu0 %v342, 4
        %v399 = vpop.permute.xlu0 %398
        %400 = vrot.lane.b32.xlu0 %v347, 4
        %v401 = vpop.permute.xlu0 %400
        %402 = vrot.lane.b32.xlu0 %v352, 4
        %v403 = vpop.permute.xlu0 %402
        %404 = vrot.lane.b32.xlu0 %v357, 4
        %v405 = vpop.permute.xlu0 %404
        %406 = vrot.lane.b32.xlu0 %v362, 4
        %v407 = vpop.permute.xlu0 %406
        %408 = vrot.lane.b32.xlu0 %v367, 4
        %v409 = vpop.permute.xlu0 %408
        %426 = vrot.lane.b32.xlu0 %v370, 4
        %v427 = vpop.permute.xlu0 %426
        %428 = vrot.lane.b32.xlu0 %v372, 4
        %v429 = vpop.permute.xlu0 %428
        %430 = vrot.lane.b32.xlu0 %v374, 4
        %v431 = vpop.permute.xlu0 %430
        %432 = vrot.lane.b32.xlu0 %v376, 4
        %v433 = vpop.permute.xlu0 %432
        %434 = vrot.lane.b32.xlu0 %v378, 4
        %v435 = vpop.permute.xlu0 %434
        %436 = vrot.lane.b32.xlu0 %v380, 4
        %v437 = vpop.permute.xlu0 %436
        %438 = vrot.lane.b32.xlu0 %v382, 4
        %v439 = vpop.permute.xlu0 %438
        %440 = vrot.lane.b32.xlu0 %v384, 4
        %v441 = vpop.permute.xlu0 %440
        %450 = vrot.lane.b32.xlu0 %v332, 8
        %v451 = vpop.permute.xlu0 %450
        %452 = vrot.lane.b32.xlu0 %v337, 8
        %v453 = vpop.permute.xlu0 %452
        %454 = vrot.lane.b32.xlu0 %v342, 8
        %v455 = vpop.permute.xlu0 %454
        %456 = vrot.lane.b32.xlu0 %v347, 8
        %v457 = vpop.permute.xlu0 %456
        %458 = vrot.lane.b32.xlu0 %v352, 8
        %v459 = vpop.permute.xlu0 %458
        %460 = vrot.lane.b32.xlu0 %v357, 8
        %v461 = vpop.permute.xlu0 %460
        %462 = vrot.lane.b32.xlu0 %v362, 8
        %v463 = vpop.permute.xlu0 %462
        %464 = vrot.lane.b32.xlu0 %v367, 8
        %v465 = vpop.permute.xlu0 %464
        %vm474 = vcmask 31744
        %v475 = vsel %vm474, %v370, %v395
        %v476 = vsel %vm474, %v372, %v397
        %v477 = vsel %vm474, %v374, %v399
        %v478 = vsel %vm474, %v376, %v401
        %v479 = vsel %vm474, %v378, %v403
        %v480 = vsel %vm474, %v380, %v405
        %v481 = vsel %vm474, %v382, %v407
        %v482 = vsel %vm474, %v384, %v409
        %v483 = vsel %vm240, %v475, %v427
        %v484 = vsel %vm240, %v476, %v429
        %v485 = vsel %vm240, %v477, %v431
        %v486 = vsel %vm240, %v478, %v433
        %v487 = vsel %vm240, %v479, %v435
        %v488 = vsel %vm240, %v480, %v437
        %v489 = vsel %vm240, %v481, %v439
        %v490 = vsel %vm240, %v482, %v441
        %vm491 = vcmask 97280
        %v492 = vsel %vm491, %v483, %v451
        %v493 = vsel %vm491, %v484, %v453
        %v494 = vsel %vm491, %v485, %v455
        %v495 = vsel %vm491, %v486, %v457
        %v496 = vsel %vm491, %v487, %v459
        %v497 = vsel %vm491, %v488, %v461
        %v498 = vsel %vm491, %v489, %v463
        %v499 = vsel %vm491, %v490, %v465
        %vm500 = vcmask 130048
        %501 = vst.msk [vmem:[%s209] sm:$0xff] %vm500, %v492
        %502 = vst.msk [vmem:[%s209 + $0x10] sm:$0xff] %vm500, %v493
        %503 = vst.msk [vmem:[%s209 + $0x20] sm:$0xff] %vm500, %v494
        %504 = vst.msk [vmem:[%s209 + $0x30] sm:$0xff] %vm500, %v495
        %505 = vst.msk [vmem:[%s209 + $0x40] sm:$0xff] %vm500, %v496
        %506 = vst.msk [vmem:[%s209 + $0x50] sm:$0xff] %vm500, %v497
        %507 = vst.msk [vmem:[%s209 + $0x60] sm:$0xff] %vm500, %v498
        %508 = vst.msk [vmem:[%s209 + $0x70] sm:$0xff] %vm500, %v499
        %509 = vrot.lane.b32.xlu0 %v332, 124
        %v510 = vpop.permute.xlu0 %509
        %511 = vrot.lane.b32.xlu0 %v337, 124
        %v512 = vpop.permute.xlu0 %511
        %513 = vrot.lane.b32.xlu0 %v342, 124
        %v514 = vpop.permute.xlu0 %513
        %515 = vrot.lane.b32.xlu0 %v347, 124
        %v516 = vpop.permute.xlu0 %515
        %517 = vrot.lane.b32.xlu0 %v352, 124
        %v518 = vpop.permute.xlu0 %517
        %519 = vrot.lane.b32.xlu0 %v357, 124
        %v520 = vpop.permute.xlu0 %519
        %521 = vrot.lane.b32.xlu0 %v362, 124
        %v522 = vpop.permute.xlu0 %521
        %523 = vrot.lane.b32.xlu0 %v367, 124
        %v524 = vpop.permute.xlu0 %523
        %541 = vrot.lane.b32.xlu0 %v371, 4
        %v542 = vpop.permute.xlu0 %541
        %543 = vrot.lane.b32.xlu0 %v373, 4
        %v544 = vpop.permute.xlu0 %543
        %545 = vrot.lane.b32.xlu0 %v375, 4
        %v546 = vpop.permute.xlu0 %545
        %547 = vrot.lane.b32.xlu0 %v377, 4
        %v548 = vpop.permute.xlu0 %547
        %549 = vrot.lane.b32.xlu0 %v379, 4
        %v550 = vpop.permute.xlu0 %549
        %551 = vrot.lane.b32.xlu0 %v381, 4
        %v552 = vpop.permute.xlu0 %551
        %553 = vrot.lane.b32.xlu0 %v383, 4
        %v554 = vpop.permute.xlu0 %553
        %555 = vrot.lane.b32.xlu0 %v385, 4
        %v556 = vpop.permute.xlu0 %555
        %v565 = vsel %vm474, %v371, %v510
        %v566 = vsel %vm474, %v373, %v512
        %v567 = vsel %vm474, %v375, %v514
        %v568 = vsel %vm474, %v377, %v516
        %v569 = vsel %vm474, %v379, %v518
        %v570 = vsel %vm474, %v381, %v520
        %v571 = vsel %vm474, %v383, %v522
        %v572 = vsel %vm474, %v385, %v524
        %v573 = vsel %vm240, %v565, %v542
        %v574 = vsel %vm240, %v566, %v544
        %v575 = vsel %vm240, %v567, %v546
        %v576 = vsel %vm240, %v568, %v548
        %v577 = vsel %vm240, %v569, %v550
        %v578 = vsel %vm240, %v570, %v552
        %v579 = vsel %vm240, %v571, %v554
        %v580 = vsel %vm240, %v572, %v556
        %v581 = vsel %vm491, %v573, %v332
        %v582 = vsel %vm491, %v574, %v337
        %v583 = vsel %vm491, %v575, %v342
        %v584 = vsel %vm491, %v576, %v347
        %v585 = vsel %vm491, %v577, %v352
        %v586 = vsel %vm491, %v578, %v357
        %v587 = vsel %vm491, %v579, %v362
        %v588 = vsel %vm491, %v580, %v367
        %s589 = scalar_lea.vmem %s209, 8 [#allocation2]
        %590 = vst.msk [vmem:[%s589] sm:$0xff] %vm500, %v581
        %591 = vst.msk [vmem:[%s589 + $0x10] sm:$0xff] %vm500, %v582
        %592 = vst.msk [vmem:[%s589 + $0x20] sm:$0xff] %vm500, %v583
        %593 = vst.msk [vmem:[%s589 + $0x30] sm:$0xff] %vm500, %v584
        %594 = vst.msk [vmem:[%s589 + $0x40] sm:$0xff] %vm500, %v585
        %595 = vst.msk [vmem:[%s589 + $0x50] sm:$0xff] %vm500, %v586
        %596 = vst.msk [vmem:[%s589 + $0x60] sm:$0xff] %vm500, %v587
        %597 = vst.msk [vmem:[%s589 + $0x70] sm:$0xff] %vm500, %v588
        %s598 = sand.u32 %s120, 1
        %s599 = scalar_lea.sflag [#allocation3], %s598
        %s600 = sand.u32 %s120, 1
        %s601 = smul.addr %s600, 128
        %s602 = scalar_lea.vmem [#allocation2], %s601
        // Predicated region
        $region37: #{tpu_custom_call.1} parent=35 // pred_check
          %p603 = pneg %p130
        $region38: #{tpu_custom_call.1} parent=35 // pred_check_branch
          %605 = sbr.rel (%p603) target = $region40
        $region39: #{tpu_custom_call.1} parent=35 // pred_region
          %s606 = smul.u32 8, %s18
          %s608 = ssub.s32 2048, 2048
          %609 = vsyncadd %s599, %s608
          %s610 = smul.addr %s606, 2
          %s611 = smul.addr %s610, 128
          %s612 = scalar_lea.hbm %s4, %s611
          %s613 = sshll.u32 %s602, 4
          %s614 = int_to_ptr.vmem [resolvable:$true] %s613
          %619 = dma.vmem_to_hbm [thread:$0]  %s614, 2048, %s612, %s599, 128, 128, 8
        $region40: #{tpu_custom_call.1} parent=35 // pred_fallthru
          _
      $region36: #{tpu_custom_call.1} parent=5 // pred_fallthru
        _
      %p620 = scmp.le.s32.totalorder 2, %s13
      // Predicated region
      $region41: #{tpu_custom_call.1} parent=5 // pred_check
        %p621 = pneg %p620
      $region42: #{tpu_custom_call.1} parent=5 // pred_check_branch
        %623 = sbr.rel (%p621) target = $region44
      $region43: #{tpu_custom_call.1} parent=5 // pred_region
        %s624 = ssub.s32 %s13, 2
        // Predicated region
        $region45: #{tpu_custom_call.1} parent=43 // pred_check
          %p625 = pneg %p136
        $region46: #{tpu_custom_call.1} parent=43 // pred_check_branch
          %627 = sbr.rel (%p625) target = $region48
        $region47: #{tpu_custom_call.1} parent=43 // pred_region
          %s628 = sand.u32 %s121, 1
          %s629 = scalar_lea.sflag [#allocation3], %s628
          %s630 = sand.u32 %s121, 1
          %s631 = smul.addr %s630, 128
          %s632 = scalar_lea.vmem [#allocation2], %s631
          %633 = dma.done %s629, 2048
        $region48: #{tpu_custom_call.1} parent=43 // pred_fallthru
          _
      $region44: #{tpu_custom_call.1} parent=5 // pred_fallthru
        _
    $region6: #{tpu_custom_call.1} parent=1 // loop_footer
      %s17 = sadd.s32 1, %s13
    $region7: #{tpu_custom_call.1} parent=1 // loop_footer_branch
      %12 = sbr.rel target = $region3
    $region8: #{tpu_custom_call.1} parent=1 // loop_exit
      _
    %634 = vsyncpa [#allocation3], 1
    %s635 = scalar_lea.sflag [#allocation3], 1
    %636 = vsyncpa %s635, 1

</llo_original>
